<compile_context>
chip_gen: v7x
topology: tpu7x:2x2x1
jax: 0.10.0
libtpu: 0.0.40
codegen_flags: <defaults>
</compile_context>

<pallas_src>
import functools

import jax
import jax.numpy as jnp
from jax.experimental import pallas as pl
from jax.experimental.pallas import tpu as pltpu


def _soft_spatial_kernel(C, x_ref, p_ref, w2_ref, o_ref):
    # x_ref : (R, 2C)   batch-major: lanes [0, C) are spatial dim 0, [C, 2C) are dim 1
    # p_ref : (8, 128)  packed params:
    #   row 0, lanes [0, C) : attention logits
    #   row 1 / row 2       : fc1 weight column 0 / 1 (zero padded to 128 lanes)
    #   row 3               : fc1 bias (zero padded)
    #   row 4               : fc2 bias (zero padded)
    # w2_ref: (128, 128) fc2 weight, transposed + zero padded (exact: zeros contribute 0)
    # o_ref : (R, 128)   lane-dense output; true output = first 6 columns

    # --- softmax over the C attention logits (exact divide) ---
    logits = p_ref[0:1, 0:C]                                   # (1, C)
    logits = logits - jnp.max(logits, axis=-1, keepdims=True)
    e = jnp.exp(logits)
    attn = e / jnp.sum(e, axis=-1, keepdims=True)              # (1, C)

    # --- attended location: one multiply + lane reduce per spatial half ---
    x = x_ref[...]                                             # (R, 2C)
    a0 = jnp.sum(x[:, 0:C] * attn, axis=-1, keepdims=True)     # (R, 1)
    a1 = jnp.sum(x[:, C:2 * C] * attn, axis=-1, keepdims=True) # (R, 1)

    # --- fc1 (in_features = 2): two VPU FMAs on lane-dense (R, 128) vregs, then ReLU ---
    h1 = a0 * p_ref[1:2, :] + a1 * p_ref[2:3, :] + p_ref[3:4, :]
    h1 = jnp.maximum(h1, 0.0)                                  # (R, 128)

    # --- fc2 on the MXU (K = N = 128), f32 accumulation ---
    out = jnp.dot(h1, w2_ref[...], preferred_element_type=jnp.float32)
    o_ref[...] = (out + p_ref[4:5, :]).astype(o_ref.dtype)     # (R, 128)


def pack_params(weights, fc1_w, fc1_b, fc2_w, fc2_b):
    """One-time parameter packing (hoisted out of the forward hot path).

    Returns:
      param_slab: (8, 128) f32 — row 0: attention logits (first C lanes);
                  rows 1-2: fc1 weight columns; row 3: fc1 bias; row 4: fc2 bias.
      fc2_wp    : (128, 128) f32 — fc2 weight transposed and zero padded.
    """
    C = weights.shape[0]
    H, in1 = fc1_w.shape            # (64, 2)
    O, in2 = fc2_w.shape            # (6, 64)
    assert in1 == 2 and in2 == H and C <= 128 and H <= 128 and O <= 128

    slab = jnp.zeros((8, 128), jnp.float32)
    slab = slab.at[0, :C].set(weights.astype(jnp.float32))
    slab = slab.at[1, :H].set(fc1_w[:, 0].astype(jnp.float32))
    slab = slab.at[2, :H].set(fc1_w[:, 1].astype(jnp.float32))
    slab = slab.at[3, :H].set(fc1_b.astype(jnp.float32))
    slab = slab.at[4, :O].set(fc2_b.astype(jnp.float32))

    fc2_wp = jnp.zeros((128, 128), jnp.float32)
    fc2_wp = fc2_wp.at[:H, :O].set(fc2_w.T.astype(jnp.float32))
    return slab, fc2_wp


def _cost(rows, C):
    HP = OP = 128
    flops = 2 * rows * HP * OP + 4 * rows * HP + 4 * rows * C
    return pl.CostEstimate(
        flops=flops,
        transcendentals=C,
        bytes_accessed=4 * (rows * 2 * C + 8 * 128 + HP * OP + rows * OP),
    )


def soft_spatial_discriminator(x, param_slab, fc2_wp, *, out_features=6,
                               grid_threshold=1024, tb=512):
    """x: (B, C, 2) f32.  param_slab, fc2_wp: outputs of pack_params().
    Returns (B, 6) f32."""
    B, C, two = x.shape
    assert two == 2
    OP = fc2_wp.shape[1]

    # Layout plumbing only: batch-major (B, 2C), spatial dim 0 then dim 1 on the lanes.
    x_row = jnp.concatenate([x[:, :, 0], x[:, :, 1]], axis=-1)      # (B, 2C)

    kernel = functools.partial(_soft_spatial_kernel, C)

    if B <= grid_threshold:
        # Small batch: single invocation — a grid would be pure per-step overhead.
        BP = max(8, ((B + 7) // 8) * 8)                             # full (8,128) tiles
        x_row = jnp.pad(x_row, ((0, BP - B), (0, 0)))
        vmem = pl.BlockSpec(memory_space=pltpu.MemorySpace.VMEM)
        out = pl.pallas_call(
            kernel,
            out_shape=jax.ShapeDtypeStruct((BP, OP), jnp.float32),
            in_specs=[vmem, vmem, vmem],
            out_specs=vmem,
            cost_estimate=_cost(BP, C),
        )(x_row, param_slab, fc2_wp)
    else:
        # Large batch: batch-parallel grid; parameters stay VMEM-resident across steps
        # (constant index_maps), batch axis sharded across TensorCores on v7x.
        TB = tb
        BP = ((B + TB - 1) // TB) * TB
        x_row = jnp.pad(x_row, ((0, BP - B), (0, 0)))
        out = pl.pallas_call(
            kernel,
            out_shape=jax.ShapeDtypeStruct((BP, OP), jnp.float32),
            grid_spec=pltpu.PrefetchScalarGridSpec(
                num_scalar_prefetch=0,
                grid=(BP // TB,),
                in_specs=[
                    pl.BlockSpec((TB, 2 * C), lambda i: (i, 0)),
                    pl.BlockSpec((8, 128), lambda i: (0, 0)),
                    pl.BlockSpec((128, 128), lambda i: (0, 0)),
                ],
                out_specs=pl.BlockSpec((TB, OP), lambda i: (i, 0)),
            ),
            compiler_params=pltpu.CompilerParams(
                dimension_semantics=("parallel",)),
            cost_estimate=_cost(BP, C),
        )(x_row, param_slab, fc2_wp)

    return out[:B, :out_features]                                   # (B, 6)


def _reference(x, weights, fc1_w, fc1_b, fc2_w, fc2_b):
    attn = jax.nn.softmax(weights, axis=0)[None, :, None]           # (1, C, 1)
    attended = jnp.sum(x * attn, axis=1)                            # (B, 2)
    h1 = jnp.maximum(attended @ fc1_w.T + fc1_b, 0.0)               # (B, 64)
    return h1 @ fc2_w.T + fc2_b                                     # (B, 6)


if __name__ == "__main__":
    latent_dimension = 32
    C = latent_dimension // 2   # 16

    key = jax.random.PRNGKey(0)
    k_x, k_w, k_w1, k_b1, k_w2, k_b2, k_x2 = jax.random.split(key, 7)

    # Deterministic synthetic parameters matching the module's __init__ shapes.
    weights = jax.random.normal(k_w, (C,), dtype=jnp.float32)        # nn.Parameter(randn(C))
    fc1_w = 0.1 * jax.random.normal(k_w1, (64, 2), dtype=jnp.float32)
    fc1_b = 0.1 * jax.random.normal(k_b1, (64,), dtype=jnp.float32)
    fc2_w = 0.1 * jax.random.normal(k_w2, (6, 64), dtype=jnp.float32)
    fc2_b = 0.1 * jax.random.normal(k_b2, (6,), dtype=jnp.float32)

    # One-time parameter packing (hoisted out of the per-call hot path).
    param_slab, fc2_wp = pack_params(weights, fc1_w, fc1_b, fc2_w, fc2_b)

    # --- small-batch path (single invocation, no grid) ---
    B = 4
    x = jax.random.normal(k_x, (B, C, 2), dtype=jnp.float32)
    out = soft_spatial_discriminator(x, param_slab, fc2_wp)
    out = jax.block_until_ready(out)
    ref = _reference(x, weights, fc1_w, fc1_b, fc2_w, fc2_b)
    assert out.shape == (B, 6)
    assert jnp.allclose(out, ref, atol=1e-4, rtol=1e-4), "small-batch mismatch vs reference"

    # --- large-batch path (batch-parallel grid, parameters resident across steps) ---
    B2 = 256
    x2 = jax.random.normal(k_x2, (B2, C, 2), dtype=jnp.float32)
    out2 = soft_spatial_discriminator(x2, param_slab, fc2_wp, grid_threshold=64, tb=128)
    out2 = jax.block_until_ready(out2)
    ref2 = _reference(x2, weights, fc1_w, fc1_b, fc2_w, fc2_b)
    assert out2.shape == (B2, 6)
    assert jnp.allclose(out2, ref2, atol=1e-4, rtol=1e-4), "gridded mismatch vs reference"

    print("KERNEL_OK")
</pallas_src>

<mosaic_0001>
module attributes {stable_mosaic.version = 11 : i64} {
  func.func @_soft_spatial_kernel(%arg0: memref<8x32xf32, #tpu.memory_space<vmem>>, %arg1: memref<8x128xf32, #tpu.memory_space<vmem>>, %arg2: memref<128x128xf32, #tpu.memory_space<vmem>>, %arg3: memref<8x128xf32, #tpu.memory_space<vmem>>) attributes {dimension_semantics = [], scalar_prefetch = 0 : i64, scratch_operands = 0 : i64, tpu.core_type = #tpu.core_type<tc>} {
    %c0 = arith.constant 0 : index
    %c0_0 = arith.constant 0 : index
    %0 = vector.load %arg1[%c0, %c0_0] : memref<8x128xf32, #tpu.memory_space<vmem>>, vector<1x16xf32>
    %cst = arith.constant dense<0xFF800000> : vector<1xf32>
    %1 = vector.multi_reduction <maximumf>, %0, %cst [1] : vector<1x16xf32> to vector<1xf32>
    %2 = vector.shape_cast %1 : vector<1xf32> to vector<1x1xf32>
    %3 = vector.broadcast %2 : vector<1x1xf32> to vector<1x16xf32>
    %4 = arith.subf %0, %3 : vector<1x16xf32>
    %5 = math.exp %4 : vector<1x16xf32>
    %cst_1 = arith.constant dense<0.000000e+00> : vector<1xf32>
    %6 = vector.multi_reduction <add>, %5, %cst_1 [1] : vector<1x16xf32> to vector<1xf32>
    %7 = vector.shape_cast %6 : vector<1xf32> to vector<1x1xf32>
    %8 = vector.broadcast %7 : vector<1x1xf32> to vector<1x16xf32>
    %9 = arith.divf %5, %8 : vector<1x16xf32>
    %c0_2 = arith.constant 0 : index
    %c0_3 = arith.constant 0 : index
    %10 = vector.load %arg0[%c0_2, %c0_3] : memref<8x32xf32, #tpu.memory_space<vmem>>, vector<8x32xf32>
    %11 = vector.extract_strided_slice %10 {offsets = [0, 0], sizes = [8, 16], strides = [1, 1]} : vector<8x32xf32> to vector<8x16xf32>
    %12 = vector.broadcast %9 : vector<1x16xf32> to vector<8x16xf32>
    %13 = arith.mulf %11, %12 : vector<8x16xf32>
    %cst_4 = arith.constant dense<0.000000e+00> : vector<8xf32>
    %14 = vector.multi_reduction <add>, %13, %cst_4 [1] : vector<8x16xf32> to vector<8xf32>
    %15 = vector.shape_cast %14 : vector<8xf32> to vector<8x1xf32>
    %16 = vector.extract_strided_slice %10 {offsets = [0, 16], sizes = [8, 16], strides = [1, 1]} : vector<8x32xf32> to vector<8x16xf32>
    %17 = vector.broadcast %9 : vector<1x16xf32> to vector<8x16xf32>
    %18 = arith.mulf %16, %17 : vector<8x16xf32>
    %cst_5 = arith.constant dense<0.000000e+00> : vector<8xf32>
    %19 = vector.multi_reduction <add>, %18, %cst_5 [1] : vector<8x16xf32> to vector<8xf32>
    %20 = vector.shape_cast %19 : vector<8xf32> to vector<8x1xf32>
    %c1 = arith.constant 1 : index
    %c0_6 = arith.constant 0 : index
    %21 = vector.load %arg1[%c1, %c0_6] : memref<8x128xf32, #tpu.memory_space<vmem>>, vector<1x128xf32>
    %22 = vector.broadcast %15 : vector<8x1xf32> to vector<8x128xf32>
    %23 = vector.broadcast %21 : vector<1x128xf32> to vector<8x128xf32>
    %24 = arith.mulf %22, %23 : vector<8x128xf32>
    %c2 = arith.constant 2 : index
    %c0_7 = arith.constant 0 : index
    %25 = vector.load %arg1[%c2, %c0_7] : memref<8x128xf32, #tpu.memory_space<vmem>>, vector<1x128xf32>
    %26 = vector.broadcast %20 : vector<8x1xf32> to vector<8x128xf32>
    %27 = vector.broadcast %25 : vector<1x128xf32> to vector<8x128xf32>
    %28 = arith.mulf %26, %27 : vector<8x128xf32>
    %29 = arith.addf %24, %28 : vector<8x128xf32>
    %c3 = arith.constant 3 : index
    %c0_8 = arith.constant 0 : index
    %30 = vector.load %arg1[%c3, %c0_8] : memref<8x128xf32, #tpu.memory_space<vmem>>, vector<1x128xf32>
    %31 = vector.broadcast %30 : vector<1x128xf32> to vector<8x128xf32>
    %32 = arith.addf %29, %31 : vector<8x128xf32>
    %cst_9 = arith.constant 0.000000e+00 : f32
    %33 = vector.broadcast %cst_9 : f32 to vector<8x128xf32>
    %34 = arith.maximumf %32, %33 : vector<8x128xf32>
    %c0_10 = arith.constant 0 : index
    %c0_11 = arith.constant 0 : index
    %35 = vector.load %arg2[%c0_10, %c0_11] : memref<128x128xf32, #tpu.memory_space<vmem>>, vector<128x128xf32>
    %cst_12 = arith.constant dense<0.000000e+00> : vector<8x128xf32>
    %36 = tpu.matmul %34, %35, %cst_12 {dimension_numbers = #tpu.dot_dimension_numbers<[1], [0], [0], [1], [0, 0, 1, 1], [], []>} : vector<8x128xf32>, vector<128x128xf32>, vector<8x128xf32> -> vector<8x128xf32>
    %c4 = arith.constant 4 : index
    %c0_13 = arith.constant 0 : index
    %37 = vector.load %arg1[%c4, %c0_13] : memref<8x128xf32, #tpu.memory_space<vmem>>, vector<1x128xf32>
    %38 = vector.broadcast %37 : vector<1x128xf32> to vector<8x128xf32>
    %39 = arith.addf %36, %38 : vector<8x128xf32>
    %c0_14 = arith.constant 0 : index
    %c0_15 = arith.constant 0 : index
    %40 = vector.load %arg3[%c0_14, %c0_15] : memref<8x128xf32, #tpu.memory_space<vmem>>, vector<8x128xf32>
    tpu.vector_store %arg3[%c0_14, %c0_15], %39 {strides = array<i32>} : memref<8x128xf32, #tpu.memory_space<vmem>>, vector<8x128xf32>,
    return
  }
}

</mosaic_0001>

<llo_original>
// kernel: tpu_custom_call.1
$region0: #{tpu_custom_call.1}
  #allocation0 [shape = 'u32[]', space=smem, size = 0x4, offset = 0x4, fixed_abs, tag = 'smem constant byte address 0x4 - core index']
  #allocation1 [shape = 'u32[144,128]{1,0:T(1,128)}', space=vmem, size = 0x12000, scoped, tag = 'internal scratch']
  %s0 = inlined_call_operand.hbm [shape: f32[8,32], index: 0, kind: input, shape index: {}]
  %s1 = inlined_call_operand.hbm [shape: f32[8,128], index: 1, kind: input, shape index: {}]
  %s2 = inlined_call_operand.hbm [shape: f32[128,128], index: 2, kind: input, shape index: {}]
  %s3 = inlined_call_operand.hbm [shape: f32[8,128], index: 3, kind: output, shape index: {}]
  %s4 = sld [smem:[#allocation0]]
  $region34: #{tpu_custom_call.1} parent=0
    _
  %s6 = ssub.s32 1, %s4
  %s7 = scalar_select 0, %s6, %s4
  $region1: #{tpu_custom_call.1} parent=0
    #allocation2 [shape = 'u8[4096]{0}', space=vmem, size = 0x1000, scoped, tag = 'input window, operand 0, single buffered']
    #allocation3 [shape = 's32[1]{0}', space=sflag, size = 0x4, scoped, tag = 'scoped memory for tpu_custom_call.1']
    #allocation4 [shape = 's32[1]{0}', space=sflag, size = 0x4, scoped, tag = 'scoped memory for tpu_custom_call.1']
    #allocation5 [shape = 'u8[4096]{0}', space=vmem, size = 0x1000, scoped, tag = 'input window, operand 1, single buffered']
    #allocation6 [shape = 's32[1]{0}', space=sflag, size = 0x4, scoped, tag = 'scoped memory for tpu_custom_call.1']
    #allocation7 [shape = 'u8[65536]{0}', space=vmem, size = 0x10000, scoped, tag = 'input window, operand 2, single buffered']
    #allocation8 [shape = 'u8[4096]{0}', space=vmem, size = 0x1000, scoped, tag = 'output window, operand 0, single buffered']
    %8 = vsyncpa [#allocation3], 0
    %9 = vsyncpa [#allocation6], 0
    %10 = vsyncpa [#allocation4], 0
    // Predicated region
    $region2: #{tpu_custom_call.1} parent=1 // pred_check
      _
    $region3: #{tpu_custom_call.1} parent=1 // pred_check_branch
      %12 = sbr.rel (0) target = $region5
    $region4: #{tpu_custom_call.1} parent=1 // pred_region
      %s14 = ssub.s32 128, 128
      %15 = vsyncadd [#allocation3], %s14
      %s17 = sshll.u32 [#allocation2], 4
      %s18 = int_to_ptr.vmem [resolvable:$true] %s17
      %20 = dma.hbm_to_vmem [thread:$0]  %s0, 128, %s18, [#allocation3]
    $region5: #{tpu_custom_call.1} parent=1 // pred_fallthru
      _
    // Predicated region
    $region6: #{tpu_custom_call.1} parent=1 // pred_check
      _
    $region7: #{tpu_custom_call.1} parent=1 // pred_check_branch
      %22 = sbr.rel (0) target = $region9
    $region8: #{tpu_custom_call.1} parent=1 // pred_region
      %s24 = ssub.s32 128, 128
      %25 = vsyncadd [#allocation6], %s24
      %s27 = sshll.u32 [#allocation5], 4
      %s28 = int_to_ptr.vmem [resolvable:$true] %s27
      %30 = dma.hbm_to_vmem [thread:$0]  %s1, 128, %s28, [#allocation6]
    $region9: #{tpu_custom_call.1} parent=1 // pred_fallthru
      _
    // Predicated region
    $region10: #{tpu_custom_call.1} parent=1 // pred_check
      _
    $region11: #{tpu_custom_call.1} parent=1 // pred_check_branch
      %32 = sbr.rel (0) target = $region13
    $region12: #{tpu_custom_call.1} parent=1 // pred_region
      %s34 = ssub.s32 2048, 2048
      %35 = vsyncadd [#allocation6], %s34
      %s36 = sshll.u32 [#allocation7], 4
      %s37 = int_to_ptr.vmem [resolvable:$true] %s36
      %42 = dma.hbm_to_vmem [thread:$0]  %s2, 2048, %s37, [#allocation6], 128, 128, 8
    $region13: #{tpu_custom_call.1} parent=1 // pred_fallthru
      _
    // Predicated region
    $region14: #{tpu_custom_call.1} parent=1 // pred_check
      _
    $region15: #{tpu_custom_call.1} parent=1 // pred_check_branch
      %44 = sbr.rel (0) target = $region17
    $region16: #{tpu_custom_call.1} parent=1 // pred_region
      %45 = dma.done [#allocation3], 128
    $region17: #{tpu_custom_call.1} parent=1 // pred_fallthru
      _
    // Predicated region
    $region18: #{tpu_custom_call.1} parent=1 // pred_check
      _
    $region19: #{tpu_custom_call.1} parent=1 // pred_check_branch
      %47 = sbr.rel (0) target = $region21
    $region20: #{tpu_custom_call.1} parent=1 // pred_region
      %48 = dma.done [#allocation6], 128
    $region21: #{tpu_custom_call.1} parent=1 // pred_fallthru
      _
    // Predicated region
    $region22: #{tpu_custom_call.1} parent=1 // pred_check
      _
    $region23: #{tpu_custom_call.1} parent=1 // pred_check_branch
      %50 = sbr.rel (0) target = $region25
    $region24: #{tpu_custom_call.1} parent=1 // pred_region
      %51 = dma.done [#allocation6], 2048
    $region25: #{tpu_custom_call.1} parent=1 // pred_fallthru
      _
    %v52 = vld [vmem:[#allocation5] sm:$0x1]
    %vm53 = vcmask 122880
    %v54 = vsel %vm53, %v52, -inf
    %55 = vmax.xlane.f32.xlu0 %v54
    %v56 = vpop.xlane.xlu0 %55
    %v57 = vsub.f32 %v52, %v56
    %v58 = vmul.f32 %v57, 1.442695
    %v59 = vpow.pop %v58
    %v60 = vsel %vm53, %v59, 0.0
    %61 = vadd.xlane.f32.xlu0 %v60
    %v62 = vpop.xlane.xlu0 %61
    %v63 = vrcp.pop %v62
    %v64 = vmul.f32 %v59, %v63
    %v65 = vld [vmem:[#allocation2] sm:$0xff]
    %v66 = vlaneseq
    %v67 = vshrl.u32 %v66, 7
    %v68 = vsub.s32 0, %v67
    %v69 = vrot.slane %v64, %v68
    %v70 = vmul.f32 %v65, %v69
    %vm71 = vcmask 130048
    %v72 = vsel %vm71, %v70, 0.0
    %73 = vadd.xlane.f32.xlu0 %v72
    %v74 = vpop.xlane.xlu0 %73
    %76 = vrot.lane.b32.xlu0 %v69, 16
    %v77 = vpop.permute.xlu0 %76
    %v79 = vmul.f32 %v65, %v77
    %81 = vrot.lane.b32.xlu0 %v79, 112
    %v82 = vpop.permute.xlu0 %81
    %v84 = vsel %vm71, %v82, 0.0
    %85 = vadd.xlane.f32.xlu0 %v84
    %v86 = vpop.xlane.xlu0 %85
    %v87 = vld [vmem:[#allocation5 + $0x1] sm:$0x1]
    %v88 = vlaneseq
    %v89 = vshrl.u32 %v88, 7
    %v90 = vsub.s32 0, %v89
    %v91 = vrot.slane %v87, %v90
    %v92 = vmul.f32 %v74, %v91
    %v93 = vld [vmem:[#allocation5 + $0x2] sm:$0x1]
    %v94 = vlaneseq
    %v95 = vshrl.u32 %v94, 7
    %v96 = vsub.s32 0, %v95
    %v97 = vrot.slane %v93, %v96
    %v98 = vmul.f32 %v86, %v97
    %v99 = vadd.f32 %v92, %v98
    %v100 = vld [vmem:[#allocation5 + $0x3] sm:$0x1]
    %v101 = vlaneseq
    %v102 = vshrl.u32 %v101, 7
    %v103 = vsub.s32 0, %v102
    %v104 = vrot.slane %v100, %v103
    %v105 = vadd.f32 %v99, %v104
    %v106 = vmax.f32 %v105, 0.0
    %v107 = vld [vmem:[#allocation7] sm:$0xff]
    %v108 = vld [vmem:[#allocation7 + $0x8] sm:$0xff]
    %v109 = vld [vmem:[#allocation7 + $0x10] sm:$0xff]
    %v110 = vld [vmem:[#allocation7 + $0x18] sm:$0xff]
    %v111 = vld [vmem:[#allocation7 + $0x20] sm:$0xff]
    %v112 = vld [vmem:[#allocation7 + $0x28] sm:$0xff]
    %v113 = vld [vmem:[#allocation7 + $0x30] sm:$0xff]
    %v114 = vld [vmem:[#allocation7 + $0x38] sm:$0xff]
    %v115 = vld [vmem:[#allocation7 + $0x40] sm:$0xff]
    %v116 = vld [vmem:[#allocation7 + $0x48] sm:$0xff]
    %v117 = vld [vmem:[#allocation7 + $0x50] sm:$0xff]
    %v118 = vld [vmem:[#allocation7 + $0x58] sm:$0xff]
    %v119 = vld [vmem:[#allocation7 + $0x60] sm:$0xff]
    %v120 = vld [vmem:[#allocation7 + $0x68] sm:$0xff]
    %v121 = vld [vmem:[#allocation7 + $0x70] sm:$0xff]
    %v122 = vld [vmem:[#allocation7 + $0x78] sm:$0xff]
    %v123 = vld [vmem:[#allocation5 + $0x4] sm:$0x1]
    %v124 = vlaneseq
    %v125 = vshrl.u32 %v124, 7
    %v126 = vsub.s32 0, %v125
    %v127 = vrot.slane %v123, %v126
    %128 = vmatprep.subr.mxu0 0.0
    %129 = vmatpush1.msra.mxu0 %v107
    %130 = vmatprep.subr.mxu0 0.0
    %131 = vmatpush1.msra.mxu0 %v108
    %132 = vmatprep.subr.mxu0 0.0
    %133 = vmatpush1.msra.mxu0 %v109
    %134 = vmatprep.subr.mxu0 0.0
    %135 = vmatpush1.msra.mxu0 %v110
    %136 = vmatprep.subr.mxu0 0.0
    %137 = vmatpush1.msra.mxu0 %v111
    %138 = vmatprep.subr.mxu0 0.0
    %139 = vmatpush1.msra.mxu0 %v112
    %140 = vmatprep.subr.mxu0 0.0
    %141 = vmatpush1.msra.mxu0 %v113
    %142 = vmatprep.subr.mxu0 0.0
    %143 = vmatpush1.msra.mxu0 %v114
    %144 = vmatprep.subr.mxu0 0.0
    %145 = vmatpush1.msra.mxu0 %v115
    %146 = vmatprep.subr.mxu0 0.0
    %147 = vmatpush1.msra.mxu0 %v116
    %148 = vmatprep.subr.mxu0 0.0
    %149 = vmatpush1.msra.mxu0 %v117
    %150 = vmatprep.subr.mxu0 0.0
    %151 = vmatpush1.msra.mxu0 %v118
    %152 = vmatprep.subr.mxu0 0.0
    %153 = vmatpush1.msra.mxu0 %v119
    %154 = vmatprep.subr.mxu0 0.0
    %155 = vmatpush1.msra.mxu0 %v120
    %156 = vmatprep.subr.mxu0 0.0
    %157 = vmatpush1.msra.mxu0 %v121
    %158 = vmatprep.subr.mxu0 0.0
    %159 = vmatpush1.msra.mxu0 %v122
    %160 = vmatprep.subr.mxu0 0.0
    %161 = vmatpush1.msra.mxu0 0.0
    %162 = vmatprep.subr.mxu0 0.0
    %163 = vmatpush1.msra.mxu0 0.0
    %164 = vmatprep.subr.mxu0 0.0
    %165 = vmatpush1.msra.mxu0 0.0
    %166 = vmatprep.subr.mxu0 0.0
    %167 = vmatpush1.msra.mxu0 0.0
    %168 = vmatprep.subr.mxu0 0.0
    %169 = vmatpush1.msra.mxu0 0.0
    %170 = vmatprep.subr.mxu0 0.0
    %171 = vmatpush1.msra.mxu0 0.0
    %172 = vmatprep.subr.mxu0 0.0
    %173 = vmatpush1.msra.mxu0 0.0
    %174 = vmatprep.subr.mxu0 0.0
    %175 = vmatpush1.msra.mxu0 0.0
    %176 = vmatprep.subr.mxu0 0.0
    %177 = vmatpush1.msra.mxu0 0.0
    %178 = vmatprep.subr.mxu0 0.0
    %179 = vmatpush1.msra.mxu0 0.0
    %180 = vmatprep.subr.mxu0 0.0
    %181 = vmatpush1.msra.mxu0 0.0
    %182 = vmatprep.subr.mxu0 0.0
    %183 = vmatpush1.msra.mxu0 0.0
    %184 = vmatprep.subr.mxu0 0.0
    %185 = vmatpush1.msra.mxu0 0.0
    %186 = vmatprep.subr.mxu0 0.0
    %187 = vmatpush1.msra.mxu0 0.0
    %188 = vmatprep.subr.mxu0 0.0
    %189 = vmatpush1.msra.mxu0 0.0
    %190 = vmatprep.subr.mxu0 0.0
    %191 = vmatpush1.msra.mxu0 0.0
    %192 = vmatprep.mubr.f32.mxu0 0.0
    %193 = vmatmul.mubr.f32.gmra.mrb[0].mxu0 %v106
    %v194 = vpop.f32.mrb[0].mxu0
    %v195 = vadd.f32 %v127, %v194
    %v196 = vpop.f32.mrb[0].mxu0
    %197 = vdwg.mxu0
    %198 = vst [vmem:[#allocation8] sm:$0xff] %v195
    // Predicated region
    $region26: #{tpu_custom_call.1} parent=1 // pred_check
      _
    $region27: #{tpu_custom_call.1} parent=1 // pred_check_branch
      %200 = sbr.rel (0) target = $region29
    $region28: #{tpu_custom_call.1} parent=1 // pred_region
      %s202 = ssub.s32 128, 128
      %203 = vsyncadd [#allocation4], %s202
      %s205 = sshll.u32 [#allocation8], 4
      %s206 = int_to_ptr.vmem [resolvable:$true] %s205
      %208 = dma.vmem_to_hbm [thread:$0]  %s206, 128, %s3, [#allocation4]
    $region29: #{tpu_custom_call.1} parent=1 // pred_fallthru
      _
    // Predicated region
    $region30: #{tpu_custom_call.1} parent=1 // pred_check
      _
    $region31: #{tpu_custom_call.1} parent=1 // pred_check_branch
      %210 = sbr.rel (0) target = $region33
    $region32: #{tpu_custom_call.1} parent=1 // pred_region
      %211 = dma.done [#allocation4], 128
    $region33: #{tpu_custom_call.1} parent=1 // pred_fallthru
      _
    %212 = vsyncpa [#allocation3], 1
    %213 = vsyncpa [#allocation6], 1
    %214 = vsyncpa [#allocation4], 1

</llo_original>
